<compile_context>
chip_gen: v7x
topology: tpu7x:2x2x1
jax: 0.10.0
libtpu: 0.0.40
codegen_flags: <defaults>
</compile_context>

<pallas_src>
import functools

import jax
import jax.numpy as jnp
from jax.experimental import pallas as pl
from jax.experimental.pallas import tpu as pltpu


def _ema_crossen_kernel(s0_ref, s1_ref, out_ref, acc_ref, *, total_rows):
    i = pl.program_id(0)

    @pl.when(i == 0)
    def _():
        acc_ref[0, 0] = jnp.float32(0.0)

    s0 = s0_ref[...].astype(jnp.float32)          # (TM, N)
    s1 = s1_ref[...].astype(jnp.float32)          # (TM, N)
    tm, n = s0.shape

    # Global diagonal mask for this row tile: (i*TM + local_row) == col.
    row_ids = jax.lax.broadcasted_iota(jnp.int32, (tm, n), 0) + i * tm
    col_ids = jax.lax.broadcasted_iota(jnp.int32, (tm, n), 1)
    diag_mask = row_ids == col_ids

    # sim_matrix1 = sim_matrix1 - diag_embed(diag(sim_matrix1))  -> zero diag.
    s1z = jnp.where(diag_mask, jnp.float32(0.0), s1)

    # log_softmax over the virtual concatenation [s0 | s1z] along the last
    # dim; only the diagonal entries of the first half are needed:
    #   logpt[r] = s0[r, r] - logsumexp_j([s0[r, :], s1z[r, :]])
    mx = jnp.maximum(
        jnp.max(s0, axis=-1, keepdims=True),
        jnp.max(s1z, axis=-1, keepdims=True),
    )                                             # (TM, 1)
    sumexp = (jnp.sum(jnp.exp(s0 - mx), axis=-1, keepdims=True)
              + jnp.sum(jnp.exp(s1z - mx), axis=-1, keepdims=True))
    lse = mx + jnp.log(sumexp)                    # (TM, 1)

    # Diagonal of s0 for this tile (reuses diag_mask).
    diag0 = jnp.sum(jnp.where(diag_mask, s0, jnp.float32(0.0)),
                    axis=-1, keepdims=True)       # (TM, 1)

    # Sum of -logpt over this tile's rows, accumulated via the scalar path.
    acc_ref[0, 0] += jnp.sum(lse - diag0)

    @pl.when(i == pl.num_programs(0) - 1)
    def _():
        out_ref[0, 0] = acc_ref[0, 0] / jnp.float32(total_rows)


def _pick_tile_rows(m, n, itemsize, vmem_budget_bytes=16 * 1024 * 1024):
    """Largest row tile s.t. 2 inputs x 2 pipeline buffers fit the budget."""
    max_rows = max(8, vmem_budget_bytes // (4 * n * itemsize))
    target = min(max_rows, 512)   # cap so big-but-fitting M still pipelines
    if m <= target:
        return m
    for cand in (512, 256, 128, 64, 32, 16, 8):
        if cand <= target and m % cand == 0:
            return cand
    # TODO(synk): handle M not divisible by a power-of-two row tile (needs
    # masked padding of the last tile); fall back to one monolithic block.
    return m


def ema_crossen(sim_matrix0, sim_matrix1, tile_rows=None):
    """Pallas TPU implementation of ema_CrossEn.forward. Returns a scalar."""
    assert sim_matrix0.shape == sim_matrix1.shape
    m, n = sim_matrix0.shape
    assert m == n, "ema_CrossEn assumes a square similarity matrix"

    itemsize = max(jnp.dtype(sim_matrix0.dtype).itemsize,
                   jnp.dtype(sim_matrix1.dtype).itemsize)
    tm = tile_rows if tile_rows is not None else _pick_tile_rows(m, n, itemsize)
    assert m % tm == 0, "row tile must divide M"
    grid = (m // tm,)

    # TODO(synk): on v7x, split the row axis across the 2 TensorCores (per-core
    # partial sums added in the wrapper); kept serial-"arbitrary" here because
    # the SMEM accumulator is carried across grid steps.
    # TODO(synk): for very large N, add a column-tile reduction axis with an
    # online (flash-style) running max / sumexp held in (TM, 1) VMEM scratch.
    kernel = functools.partial(_ema_crossen_kernel, total_rows=m)

    out = pl.pallas_call(
        kernel,
        out_shape=jax.ShapeDtypeStruct((1, 1), jnp.float32),
        grid_spec=pltpu.PrefetchScalarGridSpec(
            num_scalar_prefetch=0,
            grid=grid,
            in_specs=[
                pl.BlockSpec((tm, n), lambda i: (i, 0)),
                pl.BlockSpec((tm, n), lambda i: (i, 0)),
            ],
            out_specs=pl.BlockSpec(memory_space=pltpu.MemorySpace.SMEM),
            scratch_shapes=[pltpu.SMEM((1, 1), jnp.float32)],
        ),
        compiler_params=pltpu.CompilerParams(
            dimension_semantics=("arbitrary",),
            vmem_limit_bytes=32 * 1024 * 1024,
        ),
        cost_estimate=pl.CostEstimate(
            flops=10 * m * n,
            transcendentals=2 * m * n + m,
            bytes_accessed=2 * m * n * itemsize + 4,
        ),
    )(sim_matrix0, sim_matrix1)
    return out[0, 0]


def _reference(sim_matrix0, sim_matrix1):
    # Pure-JAX reference mirroring the PyTorch code.
    m, n = sim_matrix0.shape
    s1 = sim_matrix1 - jnp.diag(jnp.diag(sim_matrix1))
    logits = jnp.concatenate([sim_matrix0, s1], axis=-1)
    logpt = jax.nn.log_softmax(logits, axis=-1)
    logpt_diag = jnp.diag(logpt[:, :n])
    return jnp.mean(-logpt_diag)


if __name__ == "__main__":
    key = jax.random.PRNGKey(0)
    k0, k1 = jax.random.split(key)
    m = n = 128
    sim0 = jax.random.normal(k0, (m, n), dtype=jnp.float32)
    sim1 = jax.random.normal(k1, (m, n), dtype=jnp.float32)

    ref = jax.block_until_ready(_reference(sim0, sim1))

    # Auto tile size (single tile at this small shape).
    loss = jax.block_until_ready(ema_crossen(sim0, sim1))
    assert jnp.allclose(loss, ref, atol=1e-5, rtol=1e-5), (loss, ref)

    # Forced multi-tile path: 4 row tiles exercise the grid, the offset
    # diagonal mask, and the SMEM scalar accumulator.
    loss_tiled = jax.block_until_ready(ema_crossen(sim0, sim1, tile_rows=32))
    assert jnp.allclose(loss_tiled, ref, atol=1e-5, rtol=1e-5), (loss_tiled, ref)

    print("KERNEL_OK")
</pallas_src>

<mosaic_0001>
module attributes {stable_mosaic.version = 11 : i64} {
  func.func @_ema_crossen_kernel(%arg0: i32, %arg1: memref<128x128xf32, #tpu.memory_space<vmem>>, %arg2: memref<128x128xf32, #tpu.memory_space<vmem>>, %arg3: memref<1x1xf32, #tpu.memory_space<smem>>, %arg4: memref<1x1xf32, #tpu.memory_space<smem>>) attributes {dimension_semantics = [#tpu.dimension_semantics<arbitrary>], iteration_bounds = array<i64: 1>, scalar_prefetch = 0 : i64, scratch_operands = 1 : i64, tpu.core_type = #tpu.core_type<tc>, window_params = [{transform_indices = @transform_0, window_bounds = array<i64: 128, 128>}, {transform_indices = @transform_1, window_bounds = array<i64: 128, 128>}, {transform_indices = @transform_2, window_bounds = array<i64: 1, 1>}]} {
    %c0_i32 = arith.constant 0 : i32
    %0 = arith.cmpi eq, %arg0, %c0_i32 : i32
    %1 = arith.extui %0 : i1 to i32
    %c0_i32_0 = arith.constant 0 : i32
    %2 = arith.cmpi ne, %1, %c0_i32_0 : i32
    scf.if %2 {
      %cst_17 = arith.constant 0.000000e+00 : f32
      %c0_18 = arith.constant 0 : index
      %c0_19 = arith.constant 0 : index
      %46 = memref.load %arg4[%c0_18, %c0_19] : memref<1x1xf32, #tpu.memory_space<smem>>
      memref.store %cst_17, %arg4[%c0_18, %c0_19] : memref<1x1xf32, #tpu.memory_space<smem>>
    } else {
    }
    %c0 = arith.constant 0 : index
    %c0_1 = arith.constant 0 : index
    %3 = vector.load %arg1[%c0, %c0_1] : memref<128x128xf32, #tpu.memory_space<vmem>>, vector<128x128xf32>
    %c0_2 = arith.constant 0 : index
    %c0_3 = arith.constant 0 : index
    %4 = vector.load %arg2[%c0_2, %c0_3] : memref<128x128xf32, #tpu.memory_space<vmem>>, vector<128x128xf32>
    %5 = tpu.iota {dimensions = array<i32: 0>} : vector<128x128xi32>
    %c128_i32 = arith.constant 128 : i32
    %6 = arith.muli %arg0, %c128_i32 : i32
    %7 = vector.broadcast %6 : i32 to vector<128x128xi32>
    %8 = arith.addi %5, %7 : vector<128x128xi32>
    %9 = tpu.iota {dimensions = array<i32: 1>} : vector<128x128xi32>
    %10 = arith.cmpi eq, %8, %9 : vector<128x128xi32>
    %cst = arith.constant 0.000000e+00 : f32
    %11 = vector.broadcast %cst : f32 to vector<128x128xf32>
    %12 = arith.select %10, %11, %4 : vector<128x128xi1>, vector<128x128xf32>
    %cst_4 = arith.constant dense<0xFF800000> : vector<128xf32>
    %13 = vector.multi_reduction <maximumf>, %3, %cst_4 [1] : vector<128x128xf32> to vector<128xf32>
    %14 = vector.shape_cast %13 : vector<128xf32> to vector<128x1xf32>
    %cst_5 = arith.constant dense<0xFF800000> : vector<128xf32>
    %15 = vector.multi_reduction <maximumf>, %12, %cst_5 [1] : vector<128x128xf32> to vector<128xf32>
    %16 = vector.shape_cast %15 : vector<128xf32> to vector<128x1xf32>
    %17 = arith.maximumf %14, %16 : vector<128x1xf32>
    %18 = vector.broadcast %17 : vector<128x1xf32> to vector<128x128xf32>
    %19 = arith.subf %3, %18 : vector<128x128xf32>
    %20 = math.exp %19 : vector<128x128xf32>
    %cst_6 = arith.constant dense<0.000000e+00> : vector<128xf32>
    %21 = vector.multi_reduction <add>, %20, %cst_6 [1] : vector<128x128xf32> to vector<128xf32>
    %22 = vector.shape_cast %21 : vector<128xf32> to vector<128x1xf32>
    %23 = vector.broadcast %17 : vector<128x1xf32> to vector<128x128xf32>
    %24 = arith.subf %12, %23 : vector<128x128xf32>
    %25 = math.exp %24 : vector<128x128xf32>
    %cst_7 = arith.constant dense<0.000000e+00> : vector<128xf32>
    %26 = vector.multi_reduction <add>, %25, %cst_7 [1] : vector<128x128xf32> to vector<128xf32>
    %27 = vector.shape_cast %26 : vector<128xf32> to vector<128x1xf32>
    %28 = arith.addf %22, %27 : vector<128x1xf32>
    %29 = math.log %28 : vector<128x1xf32>
    %30 = arith.addf %17, %29 : vector<128x1xf32>
    %cst_8 = arith.constant 0.000000e+00 : f32
    %31 = vector.broadcast %cst_8 : f32 to vector<128x128xf32>
    %32 = arith.select %10, %3, %31 : vector<128x128xi1>, vector<128x128xf32>
    %cst_9 = arith.constant dense<0.000000e+00> : vector<128xf32>
    %33 = vector.multi_reduction <add>, %32, %cst_9 [1] : vector<128x128xf32> to vector<128xf32>
    %34 = vector.shape_cast %33 : vector<128xf32> to vector<128x1xf32>
    %c0_10 = arith.constant 0 : index
    %c0_11 = arith.constant 0 : index
    %35 = memref.load %arg4[%c0_10, %c0_11] : memref<1x1xf32, #tpu.memory_space<smem>>
    %36 = arith.subf %30, %34 : vector<128x1xf32>
    %37 = vector.shape_cast %36 : vector<128x1xf32> to vector<1x128x1xf32>
    %cst_12 = arith.constant dense<0.000000e+00> : vector<1xf32>
    %38 = vector.multi_reduction <add>, %37, %cst_12 [1, 2] : vector<1x128x1xf32> to vector<1xf32>
    %39 = vector.shape_cast %38 : vector<1xf32> to vector<1x1x1xf32>
    %40 = vector.extract %39[0, 0, 0] : f32 from vector<1x1x1xf32>
    %41 = arith.addf %35, %40 : f32
    %c0_13 = arith.constant 0 : index
    %c0_14 = arith.constant 0 : index
    %42 = memref.load %arg4[%c0_13, %c0_14] : memref<1x1xf32, #tpu.memory_space<smem>>
    memref.store %41, %arg4[%c0_13, %c0_14] : memref<1x1xf32, #tpu.memory_space<smem>>
    %c0_i32_15 = arith.constant 0 : i32
    %43 = arith.cmpi eq, %arg0, %c0_i32_15 : i32
    %44 = arith.extui %43 : i1 to i32
    %c0_i32_16 = arith.constant 0 : i32
    %45 = arith.cmpi ne, %44, %c0_i32_16 : i32
    scf.if %45 {
      %c0_17 = arith.constant 0 : index
      %c0_18 = arith.constant 0 : index
      %46 = memref.load %arg4[%c0_17, %c0_18] : memref<1x1xf32, #tpu.memory_space<smem>>
      %cst_19 = arith.constant 1.280000e+02 : f32
      %47 = arith.divf %46, %cst_19 : f32
      %c0_20 = arith.constant 0 : index
      %c0_21 = arith.constant 0 : index
      %48 = memref.load %arg3[%c0_20, %c0_21] : memref<1x1xf32, #tpu.memory_space<smem>>
      memref.store %47, %arg3[%c0_20, %c0_21] : memref<1x1xf32, #tpu.memory_space<smem>>
    } else {
    }
    return
  }
  func.func @transform_0(%arg0: i32) -> (i32, i32) {
    %c0_i32 = arith.constant 0 : i32
    %c0_i32_0 = arith.constant 0 : i32
    return %arg0, %c0_i32 : i32, i32
  }
  func.func @transform_1(%arg0: i32) -> (i32, i32) {
    %c0_i32 = arith.constant 0 : i32
    %c0_i32_0 = arith.constant 0 : i32
    return %arg0, %c0_i32 : i32, i32
  }
  func.func @transform_2(%arg0: i32) -> (i32, i32) {
    %c0_i32 = arith.constant 0 : i32
    %c0_i32_0 = arith.constant 0 : i32
    %c0_i32_1 = arith.constant 0 : i32
    return %c0_i32, %c0_i32_0 : i32, i32
  }
}

</mosaic_0001>

<llo_original>
// kernel: tpu_custom_call.1
$region0: #{tpu_custom_call.1}
  #allocation0 [shape = 'u32[]', space=smem, size = 0x4, offset = 0x4, fixed_abs, tag = 'smem constant byte address 0x4 - core index']
  #allocation1 [shape = 'u32[144,128]{1,0:T(1,128)}', space=vmem, size = 0x12000, scoped, tag = 'internal scratch']
  #allocation2 [shape = 'f32[1,1]{1,0:T(1,128)}', space=smem, size = 0x200, scoped, tag = 'scratch operand']
  %s0 = inlined_call_operand.hbm [shape: f32[128,128], index: 0, kind: input, shape index: {}]
  %s1 = inlined_call_operand.hbm [shape: f32[128,128], index: 1, kind: input, shape index: {}]
  %s2 = inlined_call_operand.hbm [shape: f32[1,1], index: 2, kind: output, shape index: {}]
  %s3 = sld [smem:[#allocation0]]
  $region34: #{tpu_custom_call.1} parent=0
    _
  %s5 = ssub.s32 1, %s3
  %s6 = scalar_select 0, %s5, %s3
  $region1: #{tpu_custom_call.1} parent=0
    #allocation3 [shape = 'u8[65536]{0}', space=vmem, size = 0x10000, scoped, tag = 'input window, operand 0, single buffered']
    #allocation4 [shape = 's32[1]{0}', space=sflag, size = 0x4, scoped, tag = 'scoped memory for tpu_custom_call.1']
    #allocation5 [shape = 's32[1]{0}', space=sflag, size = 0x4, scoped, tag = 'scoped memory for tpu_custom_call.1']
    #allocation6 [shape = 'u8[65536]{0}', space=vmem, size = 0x10000, scoped, tag = 'input window, operand 1, single buffered']
    #allocation7 [shape = 's32[1]{0}', space=sflag, size = 0x4, scoped, tag = 'scoped memory for tpu_custom_call.1']
    #allocation8 [shape = 'u8[512]{0}', space=smem, size = 0x200, scoped, tag = 'output window, operand 0, single buffered']
    %7 = vsyncpa [#allocation4], 0
    %8 = vsyncpa [#allocation7], 0
    %9 = vsyncpa [#allocation5], 0
    // Predicated region
    $region2: #{tpu_custom_call.1} parent=1 // pred_check
      _
    $region3: #{tpu_custom_call.1} parent=1 // pred_check_branch
      %11 = sbr.rel (0) target = $region5
    $region4: #{tpu_custom_call.1} parent=1 // pred_region
      %s13 = ssub.s32 2048, 2048
      %14 = vsyncadd [#allocation4], %s13
      %s15 = sshll.u32 [#allocation3], 4
      %s16 = int_to_ptr.vmem [resolvable:$true] %s15
      %21 = dma.hbm_to_vmem [thread:$0]  %s0, 2048, %s16, [#allocation4], 128, 128, 8
    $region5: #{tpu_custom_call.1} parent=1 // pred_fallthru
      _
    // Predicated region
    $region6: #{tpu_custom_call.1} parent=1 // pred_check
      _
    $region7: #{tpu_custom_call.1} parent=1 // pred_check_branch
      %23 = sbr.rel (0) target = $region9
    $region8: #{tpu_custom_call.1} parent=1 // pred_region
      %s25 = ssub.s32 2048, 2048
      %26 = vsyncadd [#allocation7], %s25
      %s27 = sshll.u32 [#allocation6], 4
      %s28 = int_to_ptr.vmem [resolvable:$true] %s27
      %33 = dma.hbm_to_vmem [thread:$0]  %s1, 2048, %s28, [#allocation7], 128, 128, 8
    $region9: #{tpu_custom_call.1} parent=1 // pred_fallthru
      _
    // Predicated region
    $region10: #{tpu_custom_call.1} parent=1 // pred_check
      _
    $region11: #{tpu_custom_call.1} parent=1 // pred_check_branch
      %35 = sbr.rel (0) target = $region13
    $region12: #{tpu_custom_call.1} parent=1 // pred_region
      %36 = dma.done [#allocation4], 2048
    $region13: #{tpu_custom_call.1} parent=1 // pred_fallthru
      _
    // Predicated region
    $region14: #{tpu_custom_call.1} parent=1 // pred_check
      _
    $region15: #{tpu_custom_call.1} parent=1 // pred_check_branch
      %38 = sbr.rel (0) target = $region17
    $region16: #{tpu_custom_call.1} parent=1 // pred_region
      %39 = dma.done [#allocation7], 2048
    $region17: #{tpu_custom_call.1} parent=1 // pred_fallthru
      _
    %p40 = scmp.eq.s32.totalorder 0, 0
    // Predicated region
    $region18: #{tpu_custom_call.1} parent=1 // pred_check
      %p41 = pneg %p40
    $region19: #{tpu_custom_call.1} parent=1 // pred_check_branch
      %43 = sbr.rel (%p41) target = $region21
    $region20: #{tpu_custom_call.1} parent=1 // pred_region
      %s44 = scalar_lea.smem [#allocation2], 0
      %45 = sst [smem:[%s44]] 0.0
    $region21: #{tpu_custom_call.1} parent=1 // pred_fallthru
      _
    %v46 = vld [vmem:[#allocation3] sm:$0xff]
    %v47 = vld [vmem:[#allocation3 + $0x8] sm:$0xff]
    %v48 = vld [vmem:[#allocation3 + $0x10] sm:$0xff]
    %v49 = vld [vmem:[#allocation3 + $0x18] sm:$0xff]
    %v50 = vld [vmem:[#allocation3 + $0x20] sm:$0xff]
    %v51 = vld [vmem:[#allocation3 + $0x28] sm:$0xff]
    %v52 = vld [vmem:[#allocation3 + $0x30] sm:$0xff]
    %v53 = vld [vmem:[#allocation3 + $0x38] sm:$0xff]
    %v54 = vld [vmem:[#allocation3 + $0x40] sm:$0xff]
    %v55 = vld [vmem:[#allocation3 + $0x48] sm:$0xff]
    %v56 = vld [vmem:[#allocation3 + $0x50] sm:$0xff]
    %v57 = vld [vmem:[#allocation3 + $0x58] sm:$0xff]
    %v58 = vld [vmem:[#allocation3 + $0x60] sm:$0xff]
    %v59 = vld [vmem:[#allocation3 + $0x68] sm:$0xff]
    %v60 = vld [vmem:[#allocation3 + $0x70] sm:$0xff]
    %v61 = vld [vmem:[#allocation3 + $0x78] sm:$0xff]
    %v62 = vld [vmem:[#allocation6] sm:$0xff]
    %v63 = vld [vmem:[#allocation6 + $0x8] sm:$0xff]
    %v64 = vld [vmem:[#allocation6 + $0x10] sm:$0xff]
    %v65 = vld [vmem:[#allocation6 + $0x18] sm:$0xff]
    %v66 = vld [vmem:[#allocation6 + $0x20] sm:$0xff]
    %v67 = vld [vmem:[#allocation6 + $0x28] sm:$0xff]
    %v68 = vld [vmem:[#allocation6 + $0x30] sm:$0xff]
    %v69 = vld [vmem:[#allocation6 + $0x38] sm:$0xff]
    %v70 = vld [vmem:[#allocation6 + $0x40] sm:$0xff]
    %v71 = vld [vmem:[#allocation6 + $0x48] sm:$0xff]
    %v72 = vld [vmem:[#allocation6 + $0x50] sm:$0xff]
    %v73 = vld [vmem:[#allocation6 + $0x58] sm:$0xff]
    %v74 = vld [vmem:[#allocation6 + $0x60] sm:$0xff]
    %v75 = vld [vmem:[#allocation6 + $0x68] sm:$0xff]
    %v76 = vld [vmem:[#allocation6 + $0x70] sm:$0xff]
    %v77 = vld [vmem:[#allocation6 + $0x78] sm:$0xff]
    %v78 = vlaneseq
    %v79 = vshrl.u32 %v78, 7
    %v80 = vadd.s32 %v79, 8
    %v81 = vadd.s32 %v79, 16
    %v82 = vadd.s32 %v79, 24
    %v83 = vadd.s32 %v79, 32
    %v84 = vadd.s32 %v79, 40
    %v85 = vadd.s32 %v79, 48
    %v86 = vadd.s32 %v79, 56
    %v87 = vadd.s32 %v79, 64
    %v88 = vadd.s32 %v79, 72
    %v89 = vadd.s32 %v79, 80
    %v90 = vadd.s32 %v79, 88
    %v91 = vadd.s32 %v79, 96
    %v92 = vadd.s32 %v79, 104
    %v93 = vadd.s32 %v79, 112
    %v94 = vadd.s32 %v79, 120
    %s95 = smul.u32 0, 128
    %v96 = vstv %s95
    %v97 = vadd.s32 %v79, %v96
    %v98 = vadd.s32 %v80, %v96
    %v99 = vadd.s32 %v81, %v96
    %v100 = vadd.s32 %v82, %v96
    %v101 = vadd.s32 %v83, %v96
    %v102 = vadd.s32 %v84, %v96
    %v103 = vadd.s32 %v85, %v96
    %v104 = vadd.s32 %v86, %v96
    %v105 = vadd.s32 %v87, %v96
    %v106 = vadd.s32 %v88, %v96
    %v107 = vadd.s32 %v89, %v96
    %v108 = vadd.s32 %v90, %v96
    %v109 = vadd.s32 %v91, %v96
    %v110 = vadd.s32 %v92, %v96
    %v111 = vadd.s32 %v93, %v96
    %v112 = vadd.s32 %v94, %v96
    %v113 = vlaneseq
    %v114 = vand.u32 %v113, 127
    %vm115 = vcmp.eq.s32.totalorder %v97, %v114
    %vm116 = vcmp.eq.s32.totalorder %v98, %v114
    %vm117 = vcmp.eq.s32.totalorder %v99, %v114
    %vm118 = vcmp.eq.s32.totalorder %v100, %v114
    %vm119 = vcmp.eq.s32.totalorder %v101, %v114
    %vm120 = vcmp.eq.s32.totalorder %v102, %v114
    %vm121 = vcmp.eq.s32.totalorder %v103, %v114
    %vm122 = vcmp.eq.s32.totalorder %v104, %v114
    %vm123 = vcmp.eq.s32.totalorder %v105, %v114
    %vm124 = vcmp.eq.s32.totalorder %v106, %v114
    %vm125 = vcmp.eq.s32.totalorder %v107, %v114
    %vm126 = vcmp.eq.s32.totalorder %v108, %v114
    %vm127 = vcmp.eq.s32.totalorder %v109, %v114
    %vm128 = vcmp.eq.s32.totalorder %v110, %v114
    %vm129 = vcmp.eq.s32.totalorder %v111, %v114
    %vm130 = vcmp.eq.s32.totalorder %v112, %v114
    %v131 = vsel %vm115, 0.0, %v62
    %v132 = vsel %vm116, 0.0, %v63
    %v133 = vsel %vm117, 0.0, %v64
    %v134 = vsel %vm118, 0.0, %v65
    %v135 = vsel %vm119, 0.0, %v66
    %v136 = vsel %vm120, 0.0, %v67
    %v137 = vsel %vm121, 0.0, %v68
    %v138 = vsel %vm122, 0.0, %v69
    %v139 = vsel %vm123, 0.0, %v70
    %v140 = vsel %vm124, 0.0, %v71
    %v141 = vsel %vm125, 0.0, %v72
    %v142 = vsel %vm126, 0.0, %v73
    %v143 = vsel %vm127, 0.0, %v74
    %v144 = vsel %vm128, 0.0, %v75
    %v145 = vsel %vm129, 0.0, %v76
    %v146 = vsel %vm130, 0.0, %v77
    %147 = vmax.xlane.f32.xlu0 %v46
    %v148 = vpop.xlane.xlu0 %147
    %149 = vmax.xlane.f32.xlu0 %v47
    %v150 = vpop.xlane.xlu0 %149
    %151 = vmax.xlane.f32.xlu0 %v48
    %v152 = vpop.xlane.xlu0 %151
    %153 = vmax.xlane.f32.xlu0 %v49
    %v154 = vpop.xlane.xlu0 %153
    %155 = vmax.xlane.f32.xlu0 %v50
    %v156 = vpop.xlane.xlu0 %155
    %157 = vmax.xlane.f32.xlu0 %v51
    %v158 = vpop.xlane.xlu0 %157
    %159 = vmax.xlane.f32.xlu0 %v52
    %v160 = vpop.xlane.xlu0 %159
    %161 = vmax.xlane.f32.xlu0 %v53
    %v162 = vpop.xlane.xlu0 %161
    %163 = vmax.xlane.f32.xlu0 %v54
    %v164 = vpop.xlane.xlu0 %163
    %165 = vmax.xlane.f32.xlu0 %v55
    %v166 = vpop.xlane.xlu0 %165
    %167 = vmax.xlane.f32.xlu0 %v56
    %v168 = vpop.xlane.xlu0 %167
    %169 = vmax.xlane.f32.xlu0 %v57
    %v170 = vpop.xlane.xlu0 %169
    %171 = vmax.xlane.f32.xlu0 %v58
    %v172 = vpop.xlane.xlu0 %171
    %173 = vmax.xlane.f32.xlu0 %v59
    %v174 = vpop.xlane.xlu0 %173
    %175 = vmax.xlane.f32.xlu0 %v60
    %v176 = vpop.xlane.xlu0 %175
    %177 = vmax.xlane.f32.xlu0 %v61
    %v178 = vpop.xlane.xlu0 %177
    %179 = vmax.xlane.f32.xlu0 %v131
    %v180 = vpop.xlane.xlu0 %179
    %181 = vmax.xlane.f32.xlu0 %v132
    %v182 = vpop.xlane.xlu0 %181
    %183 = vmax.xlane.f32.xlu0 %v133
    %v184 = vpop.xlane.xlu0 %183
    %185 = vmax.xlane.f32.xlu0 %v134
    %v186 = vpop.xlane.xlu0 %185
    %187 = vmax.xlane.f32.xlu0 %v135
    %v188 = vpop.xlane.xlu0 %187
    %189 = vmax.xlane.f32.xlu0 %v136
    %v190 = vpop.xlane.xlu0 %189
    %191 = vmax.xlane.f32.xlu0 %v137
    %v192 = vpop.xlane.xlu0 %191
    %193 = vmax.xlane.f32.xlu0 %v138
    %v194 = vpop.xlane.xlu0 %193
    %195 = vmax.xlane.f32.xlu0 %v139
    %v196 = vpop.xlane.xlu0 %195
    %197 = vmax.xlane.f32.xlu0 %v140
    %v198 = vpop.xlane.xlu0 %197
    %199 = vmax.xlane.f32.xlu0 %v141
    %v200 = vpop.xlane.xlu0 %199
    %201 = vmax.xlane.f32.xlu0 %v142
    %v202 = vpop.xlane.xlu0 %201
    %203 = vmax.xlane.f32.xlu0 %v143
    %v204 = vpop.xlane.xlu0 %203
    %205 = vmax.xlane.f32.xlu0 %v144
    %v206 = vpop.xlane.xlu0 %205
    %207 = vmax.xlane.f32.xlu0 %v145
    %v208 = vpop.xlane.xlu0 %207
    %209 = vmax.xlane.f32.xlu0 %v146
    %v210 = vpop.xlane.xlu0 %209
    %v211 = vmax.f32 %v148, %v180
    %v212 = vmax.f32 %v150, %v182
    %v213 = vmax.f32 %v152, %v184
    %v214 = vmax.f32 %v154, %v186
    %v215 = vmax.f32 %v156, %v188
    %v216 = vmax.f32 %v158, %v190
    %v217 = vmax.f32 %v160, %v192
    %v218 = vmax.f32 %v162, %v194
    %v219 = vmax.f32 %v164, %v196
    %v220 = vmax.f32 %v166, %v198
    %v221 = vmax.f32 %v168, %v200
    %v222 = vmax.f32 %v170, %v202
    %v223 = vmax.f32 %v172, %v204
    %v224 = vmax.f32 %v174, %v206
    %v225 = vmax.f32 %v176, %v208
    %v226 = vmax.f32 %v178, %v210
    %v227 = vsub.f32 %v46, %v211
    %v228 = vsub.f32 %v47, %v212
    %v229 = vsub.f32 %v48, %v213
    %v230 = vsub.f32 %v49, %v214
    %v231 = vsub.f32 %v50, %v215
    %v232 = vsub.f32 %v51, %v216
    %v233 = vsub.f32 %v52, %v217
    %v234 = vsub.f32 %v53, %v218
    %v235 = vsub.f32 %v54, %v219
    %v236 = vsub.f32 %v55, %v220
    %v237 = vsub.f32 %v56, %v221
    %v238 = vsub.f32 %v57, %v222
    %v239 = vsub.f32 %v58, %v223
    %v240 = vsub.f32 %v59, %v224
    %v241 = vsub.f32 %v60, %v225
    %v242 = vsub.f32 %v61, %v226
    %v243 = vmul.f32 %v227, 1.442695
    %v244 = vpow.pop %v243
    %v245 = vmul.f32 %v228, 1.442695
    %v246 = vpow.pop %v245
    %v247 = vmul.f32 %v229, 1.442695
    %v248 = vpow.pop %v247
    %v249 = vmul.f32 %v230, 1.442695
    %v250 = vpow.pop %v249
    %v251 = vmul.f32 %v231, 1.442695
    %v252 = vpow.pop %v251
    %v253 = vmul.f32 %v232, 1.442695
    %v254 = vpow.pop %v253
    %v255 = vmul.f32 %v233, 1.442695
    %v256 = vpow.pop %v255
    %v257 = vmul.f32 %v234, 1.442695
    %v258 = vpow.pop %v257
    %v259 = vmul.f32 %v235, 1.442695
    %v260 = vpow.pop %v259
    %v261 = vmul.f32 %v236, 1.442695
    %v262 = vpow.pop %v261
    %v263 = vmul.f32 %v237, 1.442695
    %v264 = vpow.pop %v263
    %v265 = vmul.f32 %v238, 1.442695
    %v266 = vpow.pop %v265
    %v267 = vmul.f32 %v239, 1.442695
    %v268 = vpow.pop %v267
    %v269 = vmul.f32 %v240, 1.442695
    %v270 = vpow.pop %v269
    %v271 = vmul.f32 %v241, 1.442695
    %v272 = vpow.pop %v271
    %v273 = vmul.f32 %v242, 1.442695
    %v274 = vpow.pop %v273
    %275 = vadd.xlane.f32.xlu0 %v244
    %v276 = vpop.xlane.xlu0 %275
    %277 = vadd.xlane.f32.xlu0 %v246
    %v278 = vpop.xlane.xlu0 %277
    %279 = vadd.xlane.f32.xlu0 %v248
    %v280 = vpop.xlane.xlu0 %279
    %281 = vadd.xlane.f32.xlu0 %v250
    %v282 = vpop.xlane.xlu0 %281
    %283 = vadd.xlane.f32.xlu0 %v252
    %v284 = vpop.xlane.xlu0 %283
    %285 = vadd.xlane.f32.xlu0 %v254
    %v286 = vpop.xlane.xlu0 %285
    %287 = vadd.xlane.f32.xlu0 %v256
    %v288 = vpop.xlane.xlu0 %287
    %289 = vadd.xlane.f32.xlu0 %v258
    %v290 = vpop.xlane.xlu0 %289
    %291 = vadd.xlane.f32.xlu0 %v260
    %v292 = vpop.xlane.xlu0 %291
    %293 = vadd.xlane.f32.xlu0 %v262
    %v294 = vpop.xlane.xlu0 %293
    %295 = vadd.xlane.f32.xlu0 %v264
    %v296 = vpop.xlane.xlu0 %295
    %297 = vadd.xlane.f32.xlu0 %v266
    %v298 = vpop.xlane.xlu0 %297
    %299 = vadd.xlane.f32.xlu0 %v268
    %v300 = vpop.xlane.xlu0 %299
    %301 = vadd.xlane.f32.xlu0 %v270
    %v302 = vpop.xlane.xlu0 %301
    %303 = vadd.xlane.f32.xlu0 %v272
    %v304 = vpop.xlane.xlu0 %303
    %305 = vadd.xlane.f32.xlu0 %v274
    %v306 = vpop.xlane.xlu0 %305
    %v307 = vsub.f32 %v131, %v211
    %v308 = vsub.f32 %v132, %v212
    %v309 = vsub.f32 %v133, %v213
    %v310 = vsub.f32 %v134, %v214
    %v311 = vsub.f32 %v135, %v215
    %v312 = vsub.f32 %v136, %v216
    %v313 = vsub.f32 %v137, %v217
    %v314 = vsub.f32 %v138, %v218
    %v315 = vsub.f32 %v139, %v219
    %v316 = vsub.f32 %v140, %v220
    %v317 = vsub.f32 %v141, %v221
    %v318 = vsub.f32 %v142, %v222
    %v319 = vsub.f32 %v143, %v223
    %v320 = vsub.f32 %v144, %v224
    %v321 = vsub.f32 %v145, %v225
    %v322 = vsub.f32 %v146, %v226
    %v323 = vmul.f32 %v307, 1.442695
    %v324 = vpow.pop %v323
    %v325 = vmul.f32 %v308, 1.442695
    %v326 = vpow.pop %v325
    %v327 = vmul.f32 %v309, 1.442695
    %v328 = vpow.pop %v327
    %v329 = vmul.f32 %v310, 1.442695
    %v330 = vpow.pop %v329
    %v331 = vmul.f32 %v311, 1.442695
    %v332 = vpow.pop %v331
    %v333 = vmul.f32 %v312, 1.442695
    %v334 = vpow.pop %v333
    %v335 = vmul.f32 %v313, 1.442695
    %v336 = vpow.pop %v335
    %v337 = vmul.f32 %v314, 1.442695
    %v338 = vpow.pop %v337
    %v339 = vmul.f32 %v315, 1.442695
    %v340 = vpow.pop %v339
    %v341 = vmul.f32 %v316, 1.442695
    %v342 = vpow.pop %v341
    %v343 = vmul.f32 %v317, 1.442695
    %v344 = vpow.pop %v343
    %v345 = vmul.f32 %v318, 1.442695
    %v346 = vpow.pop %v345
    %v347 = vmul.f32 %v319, 1.442695
    %v348 = vpow.pop %v347
    %v349 = vmul.f32 %v320, 1.442695
    %v350 = vpow.pop %v349
    %v351 = vmul.f32 %v321, 1.442695
    %v352 = vpow.pop %v351
    %v353 = vmul.f32 %v322, 1.442695
    %v354 = vpow.pop %v353
    %355 = vadd.xlane.f32.xlu0 %v324
    %v356 = vpop.xlane.xlu0 %355
    %357 = vadd.xlane.f32.xlu0 %v326
    %v358 = vpop.xlane.xlu0 %357
    %359 = vadd.xlane.f32.xlu0 %v328
    %v360 = vpop.xlane.xlu0 %359
    %361 = vadd.xlane.f32.xlu0 %v330
    %v362 = vpop.xlane.xlu0 %361
    %363 = vadd.xlane.f32.xlu0 %v332
    %v364 = vpop.xlane.xlu0 %363
    %365 = vadd.xlane.f32.xlu0 %v334
    %v366 = vpop.xlane.xlu0 %365
    %367 = vadd.xlane.f32.xlu0 %v336
    %v368 = vpop.xlane.xlu0 %367
    %369 = vadd.xlane.f32.xlu0 %v338
    %v370 = vpop.xlane.xlu0 %369
    %371 = vadd.xlane.f32.xlu0 %v340
    %v372 = vpop.xlane.xlu0 %371
    %373 = vadd.xlane.f32.xlu0 %v342
    %v374 = vpop.xlane.xlu0 %373
    %375 = vadd.xlane.f32.xlu0 %v344
    %v376 = vpop.xlane.xlu0 %375
    %377 = vadd.xlane.f32.xlu0 %v346
    %v378 = vpop.xlane.xlu0 %377
    %379 = vadd.xlane.f32.xlu0 %v348
    %v380 = vpop.xlane.xlu0 %379
    %381 = vadd.xlane.f32.xlu0 %v350
    %v382 = vpop.xlane.xlu0 %381
    %383 = vadd.xlane.f32.xlu0 %v352
    %v384 = vpop.xlane.xlu0 %383
    %385 = vadd.xlane.f32.xlu0 %v354
    %v386 = vpop.xlane.xlu0 %385
    %v387 = vadd.f32 %v276, %v356
    %v388 = vadd.f32 %v278, %v358
    %v389 = vadd.f32 %v280, %v360
    %v390 = vadd.f32 %v282, %v362
    %v391 = vadd.f32 %v284, %v364
    %v392 = vadd.f32 %v286, %v366
    %v393 = vadd.f32 %v288, %v368
    %v394 = vadd.f32 %v290, %v370
    %v395 = vadd.f32 %v292, %v372
    %v396 = vadd.f32 %v294, %v374
    %v397 = vadd.f32 %v296, %v376
    %v398 = vadd.f32 %v298, %v378
    %v399 = vadd.f32 %v300, %v380
    %v400 = vadd.f32 %v302, %v382
    %v401 = vadd.f32 %v304, %v384
    %v402 = vadd.f32 %v306, %v386
    %v403 = vlog2.pop %v387
    %v404 = vmul.f32 %v403, 0.6931472
    %v405 = vlog2.pop %v388
    %v406 = vmul.f32 %v405, 0.6931472
    %v407 = vlog2.pop %v389
    %v408 = vmul.f32 %v407, 0.6931472
    %v409 = vlog2.pop %v390
    %v410 = vmul.f32 %v409, 0.6931472
    %v411 = vlog2.pop %v391
    %v412 = vmul.f32 %v411, 0.6931472
    %v413 = vlog2.pop %v392
    %v414 = vmul.f32 %v413, 0.6931472
    %v415 = vlog2.pop %v393
    %v416 = vmul.f32 %v415, 0.6931472
    %v417 = vlog2.pop %v394
    %v418 = vmul.f32 %v417, 0.6931472
    %v419 = vlog2.pop %v395
    %v420 = vmul.f32 %v419, 0.6931472
    %v421 = vlog2.pop %v396
    %v422 = vmul.f32 %v421, 0.6931472
    %v423 = vlog2.pop %v397
    %v424 = vmul.f32 %v423, 0.6931472
    %v425 = vlog2.pop %v398
    %v426 = vmul.f32 %v425, 0.6931472
    %v427 = vlog2.pop %v399
    %v428 = vmul.f32 %v427, 0.6931472
    %v429 = vlog2.pop %v400
    %v430 = vmul.f32 %v429, 0.6931472
    %v431 = vlog2.pop %v401
    %v432 = vmul.f32 %v431, 0.6931472
    %v433 = vlog2.pop %v402
    %v434 = vmul.f32 %v433, 0.6931472
    %v435 = vadd.f32 %v211, %v404
    %v436 = vadd.f32 %v212, %v406
    %v437 = vadd.f32 %v213, %v408
    %v438 = vadd.f32 %v214, %v410
    %v439 = vadd.f32 %v215, %v412
    %v440 = vadd.f32 %v216, %v414
    %v441 = vadd.f32 %v217, %v416
    %v442 = vadd.f32 %v218, %v418
    %v443 = vadd.f32 %v219, %v420
    %v444 = vadd.f32 %v220, %v422
    %v445 = vadd.f32 %v221, %v424
    %v446 = vadd.f32 %v222, %v426
    %v447 = vadd.f32 %v223, %v428
    %v448 = vadd.f32 %v224, %v430
    %v449 = vadd.f32 %v225, %v432
    %v450 = vadd.f32 %v226, %v434
    %v451 = vsel %vm115, %v46, 0.0
    %v452 = vsel %vm116, %v47, 0.0
    %v453 = vsel %vm117, %v48, 0.0
    %v454 = vsel %vm118, %v49, 0.0
    %v455 = vsel %vm119, %v50, 0.0
    %v456 = vsel %vm120, %v51, 0.0
    %v457 = vsel %vm121, %v52, 0.0
    %v458 = vsel %vm122, %v53, 0.0
    %v459 = vsel %vm123, %v54, 0.0
    %v460 = vsel %vm124, %v55, 0.0
    %v461 = vsel %vm125, %v56, 0.0
    %v462 = vsel %vm126, %v57, 0.0
    %v463 = vsel %vm127, %v58, 0.0
    %v464 = vsel %vm128, %v59, 0.0
    %v465 = vsel %vm129, %v60, 0.0
    %v466 = vsel %vm130, %v61, 0.0
    %467 = vadd.xlane.f32.xlu0 %v451
    %v468 = vpop.xlane.xlu0 %467
    %469 = vadd.xlane.f32.xlu0 %v452
    %v470 = vpop.xlane.xlu0 %469
    %471 = vadd.xlane.f32.xlu0 %v453
    %v472 = vpop.xlane.xlu0 %471
    %473 = vadd.xlane.f32.xlu0 %v454
    %v474 = vpop.xlane.xlu0 %473
    %475 = vadd.xlane.f32.xlu0 %v455
    %v476 = vpop.xlane.xlu0 %475
    %477 = vadd.xlane.f32.xlu0 %v456
    %v478 = vpop.xlane.xlu0 %477
    %479 = vadd.xlane.f32.xlu0 %v457
    %v480 = vpop.xlane.xlu0 %479
    %481 = vadd.xlane.f32.xlu0 %v458
    %v482 = vpop.xlane.xlu0 %481
    %483 = vadd.xlane.f32.xlu0 %v459
    %v484 = vpop.xlane.xlu0 %483
    %485 = vadd.xlane.f32.xlu0 %v460
    %v486 = vpop.xlane.xlu0 %485
    %487 = vadd.xlane.f32.xlu0 %v461
    %v488 = vpop.xlane.xlu0 %487
    %489 = vadd.xlane.f32.xlu0 %v462
    %v490 = vpop.xlane.xlu0 %489
    %491 = vadd.xlane.f32.xlu0 %v463
    %v492 = vpop.xlane.xlu0 %491
    %493 = vadd.xlane.f32.xlu0 %v464
    %v494 = vpop.xlane.xlu0 %493
    %495 = vadd.xlane.f32.xlu0 %v465
    %v496 = vpop.xlane.xlu0 %495
    %497 = vadd.xlane.f32.xlu0 %v466
    %v498 = vpop.xlane.xlu0 %497
    %s499 = sld [smem:[#allocation2]]
    %v500 = vsub.f32 %v435, %v468
    %v501 = vsub.f32 %v436, %v470
    %v502 = vsub.f32 %v437, %v472
    %v503 = vsub.f32 %v438, %v474
    %v504 = vsub.f32 %v439, %v476
    %v505 = vsub.f32 %v440, %v478
    %v506 = vsub.f32 %v441, %v480
    %v507 = vsub.f32 %v442, %v482
    %v508 = vsub.f32 %v443, %v484
    %v509 = vsub.f32 %v444, %v486
    %v510 = vsub.f32 %v445, %v488
    %v511 = vsub.f32 %v446, %v490
    %v512 = vsub.f32 %v447, %v492
    %v513 = vsub.f32 %v448, %v494
    %v514 = vsub.f32 %v449, %v496
    %v515 = vsub.f32 %v450, %v498
    %vm516 = vcmask 7168
    %v517 = vsel %vm516, %v500, 0.0
    %v518 = vsel %vm516, %v501, 0.0
    %v519 = vadd.f32 %v517, %v518
    %v520 = vsel %vm516, %v502, 0.0
    %v521 = vadd.f32 %v519, %v520
    %v522 = vsel %vm516, %v503, 0.0
    %v523 = vadd.f32 %v521, %v522
    %v524 = vsel %vm516, %v504, 0.0
    %v525 = vadd.f32 %v523, %v524
    %v526 = vsel %vm516, %v505, 0.0
    %v527 = vadd.f32 %v525, %v526
    %v528 = vsel %vm516, %v506, 0.0
    %v529 = vadd.f32 %v527, %v528
    %v530 = vsel %vm516, %v507, 0.0
    %v531 = vadd.f32 %v529, %v530
    %v532 = vsel %vm516, %v508, 0.0
    %v533 = vadd.f32 %v531, %v532
    %v534 = vsel %vm516, %v509, 0.0
    %v535 = vadd.f32 %v533, %v534
    %v536 = vsel %vm516, %v510, 0.0
    %v537 = vadd.f32 %v535, %v536
    %v538 = vsel %vm516, %v511, 0.0
    %v539 = vadd.f32 %v537, %v538
    %v540 = vsel %vm516, %v512, 0.0
    %v541 = vadd.f32 %v539, %v540
    %v542 = vsel %vm516, %v513, 0.0
    %v543 = vadd.f32 %v541, %v542
    %v544 = vsel %vm516, %v514, 0.0
    %v545 = vadd.f32 %v543, %v544
    %v546 = vsel %vm516, %v515, 0.0
    %v547 = vadd.f32 %v545, %v546
    %548 = vadd.xlane.f32.xlu0 %v547
    %v549 = vpop.xlane.xlu0 %548
    %v550 = vrot.slane %v549, 4
    %v551 = vadd.f32 %v549, %v550
    %v552 = vrot.slane %v551, 2
    %v553 = vadd.f32 %v551, %v552
    %v554 = vrot.slane %v553, 1
    %v555 = vadd.f32 %v553, %v554
    %s556 = vtos %v555
    %s557 = sadd.f32 %s499, %s556
    %s558 = scalar_lea.smem [#allocation2], 0
    %559 = sst [smem:[%s558]] %s557
    // Predicated region
    $region22: #{tpu_custom_call.1} parent=1 // pred_check
      %p560 = pneg %p40
    $region23: #{tpu_custom_call.1} parent=1 // pred_check_branch
      %562 = sbr.rel (%p560) target = $region25
    $region24: #{tpu_custom_call.1} parent=1 // pred_region
      %s563 = sld [smem:[#allocation2]]
      %v564 = vrcp.pop 128.0
      %s565 = vtos %v564
      %s566 = smul.f32 %s563, %s565
      %s567 = scalar_lea.smem [#allocation8], 0
      %568 = sst [smem:[%s567]] %s566
    $region25: #{tpu_custom_call.1} parent=1 // pred_fallthru
      _
    // Predicated region
    $region26: #{tpu_custom_call.1} parent=1 // pred_check
      _
    $region27: #{tpu_custom_call.1} parent=1 // pred_check_branch
      %570 = sbr.rel (0) target = $region29
    $region28: #{tpu_custom_call.1} parent=1 // pred_region
      %s572 = ssub.s32 16, 16
      %573 = vsyncadd [#allocation5], %s572
      %576 = dma.smem_to_hbm [#allocation8], 16, %s2, [#allocation5]
    $region29: #{tpu_custom_call.1} parent=1 // pred_fallthru
      _
    // Predicated region
    $region30: #{tpu_custom_call.1} parent=1 // pred_check
      _
    $region31: #{tpu_custom_call.1} parent=1 // pred_check_branch
      %578 = sbr.rel (0) target = $region33
    $region32: #{tpu_custom_call.1} parent=1 // pred_region
      %579 = dma.done [#allocation5], 16
    $region33: #{tpu_custom_call.1} parent=1 // pred_fallthru
      _
    %580 = sfence
    %581 = vsyncpa [#allocation4], 1
    %582 = vsyncpa [#allocation7], 1
    %583 = vsyncpa [#allocation5], 1

</llo_original>
